<compile_context>
chip_gen: v7x
topology: tpu7x:2x2x1
jax: 0.10.0
libtpu: 0.0.40
codegen_flags: <defaults>
</compile_context>

<pallas_src>
import functools

import jax
import jax.numpy as jnp
from jax.experimental import pallas as pl
from jax.experimental.pallas import tpu as pltpu


def _round_up(x, m):
    return ((x + m - 1) // m) * m


def _as_f32(x):
    return x if x.dtype == jnp.float32 else x.astype(jnp.float32)


def _as_i32(x):
    return x if x.dtype == jnp.int32 else x.astype(jnp.int32)


def _vmem_limit_bytes(tile, d, pack_w, v_total):
    """Working-set-derived VMEM budget, capped at 75% of physical VMEM."""
    itemsize = 4
    streamed = 2 * itemsize * tile * (2 * d + pack_w)      # q + packed + out (x2 bufs)
    resident = 2 * itemsize * v_total * d                  # LUT (default 2 bufs)
    working = 6 * itemsize * tile * max(v_total, 128)      # (T,V) intermediates/spill
    need = streamed + resident + working + (4 << 20)
    try:
        phys = int(pltpu.get_tpu_info().vmem_capacity_bytes)
    except Exception:
        phys = 64 << 20                                    # v7x per-TC physical VMEM
    return int(min(max(need, 16 << 20), (phys * 3) // 4))


def _dependency_memory_kernel(q_ref, packed_ref, lut_ref, out_ref, *,
                              n_mem, inv_temper):
    tile = q_ref.shape[0]
    v_total = lut_ref.shape[0]

    # (1) One MXU matmul: every token-vs-table-row dot product, (T,D) x (V,D)^T.
    s_all = jax.lax.dot_general(
        q_ref[...], lut_ref[...], (((1,), (1,)), ((), ())),
        preferred_element_type=jnp.float32)                      # (T, V_total)

    # Lane iota hoisted out of the per-slot loops (JAX does not CSE broadcasts).
    lane = jax.lax.broadcasted_iota(jnp.int32, (tile, v_total), 1)

    # (2) Per-slot gather: combined text/type one-hot select + lane reduce.
    #     (ids are re-sliced from the VMEM ref at the use site to keep live
    #      ranges short; hits are recomputed later instead of kept live.)
    cols = []
    for m in range(n_mem):                                       # M small & static
        tid = packed_ref[:, m:m + 1]                             # (T,1) text id
        yid = packed_ref[:, n_mem + m:n_mem + m + 1]             # (T,1) type id (+V_text)
        hit = (lane == tid) | (lane == yid)                      # (T, V)
        cols.append(jnp.sum(jnp.where(hit, s_all, 0.0), axis=-1, keepdims=True))
    # Fold 1/sqrt(D) into the stacked (T, M) scores (not into q).
    scores = jnp.concatenate(cols, axis=-1) * jnp.float32(inv_temper)   # (T, M)
    mem_mask = packed_ref[:, 2 * n_mem:3 * n_mem]                       # (T, M) int32
    scores = jnp.where(mem_mask == 0, jnp.float32(-1e9), scores)

    # (3) Masked softmax over the memory axis, vectorized on (T, M).
    p = jnp.exp(scores - jnp.max(scores, axis=-1, keepdims=True))
    p = p / jnp.sum(p, axis=-1, keepdims=True)                          # (T, M)

    # (4) Scatter softmax weights into one (T, V) matrix and do a single
    #     (T,V) x (V,D) matmul for the weighted embedding sum.
    w = jnp.zeros((tile, v_total), jnp.float32)
    for m in range(n_mem):
        tid = packed_ref[:, m:m + 1]
        yid = packed_ref[:, n_mem + m:n_mem + m + 1]
        hit = (lane == tid) | (lane == yid)
        w = w + jnp.where(hit, p[:, m:m + 1], 0.0)
    attended = jnp.dot(w, lut_ref[...], preferred_element_type=jnp.float32)  # (T, D)

    # (5) Output mask (bit-exact f32, packed as int32) + residual.
    out_mask = pltpu.bitcast(packed_ref[:, 3 * n_mem:3 * n_mem + 1], jnp.float32)
    out_ref[...] = (attended * out_mask + q_ref[...]).astype(out_ref.dtype)


def dependency_memory_forward(queries, dep_text, dep_type, memory_mask,
                              output_mask, text_lut, type_lut, *, tile_tok=512):
    """queries: (B,S,D) f32; dep_text/dep_type/memory_mask: (B,S,M);
    output_mask: (B,S); text_lut: (V_text,D); type_lut: (V_type,D).
    Returns (B,S,D) f32.  Matches the PyTorch forward for B,S > 1."""
    B, S, D = queries.shape
    M = dep_text.shape[-1]
    V_text = text_lut.shape[0]
    V_type = type_lut.shape[0]
    V_total = V_text + V_type
    N = B * S
    inv_temper = 1.0 / (D ** 0.5)

    q = _as_f32(queries).reshape(N, D)
    # Both tables batched into one (V_text+V_type, D) matrix -> the kernel does
    # exactly two MXU matmuls regardless of M (type ids pre-offset by V_text).
    lut = jnp.concatenate([_as_f32(text_lut), _as_f32(type_lut)], axis=0)

    # Pack all narrow per-token streams into ONE (N, 3*M+1) int32 array so the
    # pipeline carries a single small block instead of 4 separate DMA streams.
    packed = jnp.concatenate([
        _as_i32(dep_text).reshape(N, M),
        _as_i32(dep_type).reshape(N, M) + jnp.int32(V_text),
        _as_i32(memory_mask).reshape(N, M),
        jax.lax.bitcast_convert_type(_as_f32(output_mask).reshape(N, 1), jnp.int32),
    ], axis=-1)

    # Sublane-dense token tile (multiple of 8 for f32); pad the token count.
    tile = min(tile_tok, _round_up(N, 8))
    n_pad = _round_up(N, tile)
    if n_pad != N:
        pad = n_pad - N
        q = jnp.pad(q, ((0, pad), (0, 0)))
        # Padded rows: ids 0, memory_mask 0 (fully masked -> uniform softmax, no
        # NaN) and output_mask bits 0 -> 0.0f, so the padded output is exactly 0.
        packed = jnp.pad(packed, ((0, pad), (0, 0)))
    grid = (n_pad // tile,)
    pack_w = 3 * M + 1

    kernel = functools.partial(_dependency_memory_kernel,
                               n_mem=M, inv_temper=inv_temper)

    out = pl.pallas_call(
        kernel,
        out_shape=jax.ShapeDtypeStruct((n_pad, D), jnp.float32),
        grid_spec=pltpu.PrefetchScalarGridSpec(
            num_scalar_prefetch=0,
            grid=grid,
            in_specs=[
                pl.BlockSpec((tile, D), lambda i: (i, 0)),        # queries tile
                pl.BlockSpec((tile, pack_w), lambda i: (i, 0)),   # packed ids/masks
                # Concatenated embedding table: constant block index -> DMA'd
                # once, resident in VMEM across all grid steps.
                # TODO(synk): at production vocab sizes use
                # pipeline_mode=pl.Buffered(1) + bf16 storage, or a DMA gather.
                pl.BlockSpec(lut.shape, lambda i: (0, 0)),
            ],
            out_specs=pl.BlockSpec((tile, D), lambda i: (i, 0)),
        ),
        compiler_params=pltpu.CompilerParams(
            dimension_semantics=("parallel",),   # token tiles independent (2 TCs on v7x)
            vmem_limit_bytes=_vmem_limit_bytes(tile, D, pack_w, V_total),
        ),
    )(q, packed, lut)

    return out[:N].reshape(B, S, D)


if __name__ == "__main__":
    # Small shapes consistent with the module's forward.
    B, S, D = 2, 8, 32          # batch, seq, embedding_dim
    M = 4                       # dependency-memory slots per token
    V_TEXT, V_TYPE = 64, 16     # vocab sizes of the two embeddings

    key = jax.random.PRNGKey(0)
    kq, kt, ky, km, ko, kl1, kl2 = jax.random.split(key, 7)

    queries = jax.random.normal(kq, (B, S, D), dtype=jnp.float32)
    dep_text = jax.random.randint(kt, (B, S, M), 0, V_TEXT, dtype=jnp.int32)
    dep_type = jax.random.randint(ky, (B, S, M), 0, V_TYPE, dtype=jnp.int32)
    memory_mask = jax.random.bernoulli(km, 0.7, (B, S, M)).astype(jnp.int32)
    output_mask = jax.random.bernoulli(ko, 0.8, (B, S)).astype(jnp.float32)
    # nn.Embedding default init: N(0, 1) weights.
    text_lut = jax.random.normal(kl1, (V_TEXT, D), dtype=jnp.float32)
    type_lut = jax.random.normal(kl2, (V_TYPE, D), dtype=jnp.float32)

    out = dependency_memory_forward(queries, dep_text, dep_type, memory_mask,
                                    output_mask, text_lut, type_lut)
    out = jax.block_until_ready(out)

    # Pure-JAX reference mirroring the PyTorch forward.
    temper = D ** 0.5
    emb = text_lut[dep_text] + type_lut[dep_type]                    # (B,S,M,D)
    scores = jnp.einsum('bsmd,bsd->bsm', emb, queries) / temper
    scores = jnp.where(memory_mask == 0, -1e9, scores)
    probs = jax.nn.softmax(scores, axis=-1)
    ref = jnp.einsum('bsm,bsmd->bsd', probs, emb)
    ref = ref * output_mask[..., None] + queries

    assert out.shape == (B, S, D), out.shape
    err = jnp.max(jnp.abs(out - ref))
    assert jnp.allclose(out, ref, atol=1e-4, rtol=1e-4), f"mismatch, max abs err={err}"

    # TODO(synk): PyTorch's trailing `.squeeze()` also drops B/S dims when they
    # are 1; this implementation keeps (B,S,D) semantics (B,S > 1 case).
    print("KERNEL_OK")
</pallas_src>

<mosaic_0001>
module attributes {stable_mosaic.version = 11 : i64} {
  func.func @_dependency_memory_kernel(%arg0: i32, %arg1: memref<16x32xf32, #tpu.memory_space<vmem>>, %arg2: memref<16x13xi32, #tpu.memory_space<vmem>>, %arg3: memref<80x32xf32, #tpu.memory_space<vmem>>, %arg4: memref<16x32xf32, #tpu.memory_space<vmem>>) attributes {dimension_semantics = [#tpu.dimension_semantics<parallel>], iteration_bounds = array<i64: 1>, scalar_prefetch = 0 : i64, scratch_operands = 0 : i64, tpu.core_type = #tpu.core_type<tc>, window_params = [{transform_indices = @transform_0, window_bounds = array<i64: 16, 32>}, {transform_indices = @transform_1, window_bounds = array<i64: 16, 13>}, {pipeline_mode = #tpu.pipeline_mode<synchronous>, transform_indices = @transform_2, window_bounds = array<i64: 80, 32>}, {transform_indices = @transform_3, window_bounds = array<i64: 16, 32>}]} {
    %c0 = arith.constant 0 : index
    %c0_0 = arith.constant 0 : index
    %0 = vector.load %arg1[%c0, %c0_0] : memref<16x32xf32, #tpu.memory_space<vmem>>, vector<16x32xf32>
    %c0_1 = arith.constant 0 : index
    %c0_2 = arith.constant 0 : index
    %1 = vector.load %arg3[%c0_1, %c0_2] : memref<80x32xf32, #tpu.memory_space<vmem>>, vector<80x32xf32>
    %cst = arith.constant dense<0.000000e+00> : vector<16x80xf32>
    %2 = tpu.matmul %0, %1, %cst {dimension_numbers = #tpu.dot_dimension_numbers<[1], [1], [0], [0], [0, 0, 1, 0], [], []>} : vector<16x32xf32>, vector<80x32xf32>, vector<16x80xf32> -> vector<16x80xf32>
    %3 = tpu.iota {dimensions = array<i32: 1>} : vector<16x80xi32>
    %c0_3 = arith.constant 0 : index
    %c0_4 = arith.constant 0 : index
    %4 = vector.load %arg2[%c0_3, %c0_4] : memref<16x13xi32, #tpu.memory_space<vmem>>, vector<16x1xi32>
    %c0_5 = arith.constant 0 : index
    %c4 = arith.constant 4 : index
    %5 = vector.load %arg2[%c0_5, %c4] : memref<16x13xi32, #tpu.memory_space<vmem>>, vector<16x1xi32>
    %6 = vector.broadcast %4 : vector<16x1xi32> to vector<16x80xi32>
    %7 = arith.cmpi eq, %3, %6 : vector<16x80xi32>
    %8 = vector.broadcast %5 : vector<16x1xi32> to vector<16x80xi32>
    %9 = arith.cmpi eq, %3, %8 : vector<16x80xi32>
    %10 = arith.ori %7, %9 : vector<16x80xi1>
    %cst_6 = arith.constant 0.000000e+00 : f32
    %11 = vector.broadcast %cst_6 : f32 to vector<16x80xf32>
    %12 = arith.select %10, %2, %11 : vector<16x80xi1>, vector<16x80xf32>
    %cst_7 = arith.constant dense<0.000000e+00> : vector<16xf32>
    %13 = vector.multi_reduction <add>, %12, %cst_7 [1] : vector<16x80xf32> to vector<16xf32>
    %14 = vector.shape_cast %13 : vector<16xf32> to vector<16x1xf32>
    %c0_8 = arith.constant 0 : index
    %c1 = arith.constant 1 : index
    %15 = vector.load %arg2[%c0_8, %c1] : memref<16x13xi32, #tpu.memory_space<vmem>>, vector<16x1xi32>
    %c0_9 = arith.constant 0 : index
    %c5 = arith.constant 5 : index
    %16 = vector.load %arg2[%c0_9, %c5] : memref<16x13xi32, #tpu.memory_space<vmem>>, vector<16x1xi32>
    %17 = vector.broadcast %15 : vector<16x1xi32> to vector<16x80xi32>
    %18 = arith.cmpi eq, %3, %17 : vector<16x80xi32>
    %19 = vector.broadcast %16 : vector<16x1xi32> to vector<16x80xi32>
    %20 = arith.cmpi eq, %3, %19 : vector<16x80xi32>
    %21 = arith.ori %18, %20 : vector<16x80xi1>
    %cst_10 = arith.constant 0.000000e+00 : f32
    %22 = vector.broadcast %cst_10 : f32 to vector<16x80xf32>
    %23 = arith.select %21, %2, %22 : vector<16x80xi1>, vector<16x80xf32>
    %cst_11 = arith.constant dense<0.000000e+00> : vector<16xf32>
    %24 = vector.multi_reduction <add>, %23, %cst_11 [1] : vector<16x80xf32> to vector<16xf32>
    %25 = vector.shape_cast %24 : vector<16xf32> to vector<16x1xf32>
    %c0_12 = arith.constant 0 : index
    %c2 = arith.constant 2 : index
    %26 = vector.load %arg2[%c0_12, %c2] : memref<16x13xi32, #tpu.memory_space<vmem>>, vector<16x1xi32>
    %c0_13 = arith.constant 0 : index
    %c6 = arith.constant 6 : index
    %27 = vector.load %arg2[%c0_13, %c6] : memref<16x13xi32, #tpu.memory_space<vmem>>, vector<16x1xi32>
    %28 = vector.broadcast %26 : vector<16x1xi32> to vector<16x80xi32>
    %29 = arith.cmpi eq, %3, %28 : vector<16x80xi32>
    %30 = vector.broadcast %27 : vector<16x1xi32> to vector<16x80xi32>
    %31 = arith.cmpi eq, %3, %30 : vector<16x80xi32>
    %32 = arith.ori %29, %31 : vector<16x80xi1>
    %cst_14 = arith.constant 0.000000e+00 : f32
    %33 = vector.broadcast %cst_14 : f32 to vector<16x80xf32>
    %34 = arith.select %32, %2, %33 : vector<16x80xi1>, vector<16x80xf32>
    %cst_15 = arith.constant dense<0.000000e+00> : vector<16xf32>
    %35 = vector.multi_reduction <add>, %34, %cst_15 [1] : vector<16x80xf32> to vector<16xf32>
    %36 = vector.shape_cast %35 : vector<16xf32> to vector<16x1xf32>
    %c0_16 = arith.constant 0 : index
    %c3 = arith.constant 3 : index
    %37 = vector.load %arg2[%c0_16, %c3] : memref<16x13xi32, #tpu.memory_space<vmem>>, vector<16x1xi32>
    %c0_17 = arith.constant 0 : index
    %c7 = arith.constant 7 : index
    %38 = vector.load %arg2[%c0_17, %c7] : memref<16x13xi32, #tpu.memory_space<vmem>>, vector<16x1xi32>
    %39 = vector.broadcast %37 : vector<16x1xi32> to vector<16x80xi32>
    %40 = arith.cmpi eq, %3, %39 : vector<16x80xi32>
    %41 = vector.broadcast %38 : vector<16x1xi32> to vector<16x80xi32>
    %42 = arith.cmpi eq, %3, %41 : vector<16x80xi32>
    %43 = arith.ori %40, %42 : vector<16x80xi1>
    %cst_18 = arith.constant 0.000000e+00 : f32
    %44 = vector.broadcast %cst_18 : f32 to vector<16x80xf32>
    %45 = arith.select %43, %2, %44 : vector<16x80xi1>, vector<16x80xf32>
    %cst_19 = arith.constant dense<0.000000e+00> : vector<16xf32>
    %46 = vector.multi_reduction <add>, %45, %cst_19 [1] : vector<16x80xf32> to vector<16xf32>
    %47 = vector.shape_cast %46 : vector<16xf32> to vector<16x1xf32>
    %48 = tpu.concatenate %14, %25, %36, %47 in 1 : vector<16x1xf32>, vector<16x1xf32>, vector<16x1xf32>, vector<16x1xf32> -> vector<16x4xf32>
    %cst_20 = arith.constant 0.176776692 : f32
    %49 = vector.broadcast %cst_20 : f32 to vector<16x4xf32>
    %50 = arith.mulf %48, %49 : vector<16x4xf32>
    %c0_21 = arith.constant 0 : index
    %c8 = arith.constant 8 : index
    %51 = vector.load %arg2[%c0_21, %c8] : memref<16x13xi32, #tpu.memory_space<vmem>>, vector<16x4xi32>
    %c0_i32 = arith.constant 0 : i32
    %52 = vector.broadcast %c0_i32 : i32 to vector<16x4xi32>
    %53 = arith.cmpi eq, %51, %52 : vector<16x4xi32>
    %cst_22 = arith.constant -1.000000e+09 : f32
    %54 = vector.broadcast %cst_22 : f32 to vector<16x4xf32>
    %55 = arith.select %53, %54, %50 : vector<16x4xi1>, vector<16x4xf32>
    %cst_23 = arith.constant dense<0xFF800000> : vector<16xf32>
    %56 = vector.multi_reduction <maximumf>, %55, %cst_23 [1] : vector<16x4xf32> to vector<16xf32>
    %57 = vector.shape_cast %56 : vector<16xf32> to vector<16x1xf32>
    %58 = vector.broadcast %57 : vector<16x1xf32> to vector<16x4xf32>
    %59 = arith.subf %55, %58 : vector<16x4xf32>
    %60 = math.exp %59 : vector<16x4xf32>
    %cst_24 = arith.constant dense<0.000000e+00> : vector<16xf32>
    %61 = vector.multi_reduction <add>, %60, %cst_24 [1] : vector<16x4xf32> to vector<16xf32>
    %62 = vector.shape_cast %61 : vector<16xf32> to vector<16x1xf32>
    %63 = vector.broadcast %62 : vector<16x1xf32> to vector<16x4xf32>
    %64 = arith.divf %60, %63 : vector<16x4xf32>
    %cst_25 = arith.constant 0.000000e+00 : f32
    %65 = vector.broadcast %cst_25 : f32 to vector<16x80xf32>
    %c0_26 = arith.constant 0 : index
    %c0_27 = arith.constant 0 : index
    %66 = vector.load %arg2[%c0_26, %c0_27] : memref<16x13xi32, #tpu.memory_space<vmem>>, vector<16x1xi32>
    %c0_28 = arith.constant 0 : index
    %c4_29 = arith.constant 4 : index
    %67 = vector.load %arg2[%c0_28, %c4_29] : memref<16x13xi32, #tpu.memory_space<vmem>>, vector<16x1xi32>
    %68 = vector.broadcast %66 : vector<16x1xi32> to vector<16x80xi32>
    %69 = arith.cmpi eq, %3, %68 : vector<16x80xi32>
    %70 = vector.broadcast %67 : vector<16x1xi32> to vector<16x80xi32>
    %71 = arith.cmpi eq, %3, %70 : vector<16x80xi32>
    %72 = arith.ori %69, %71 : vector<16x80xi1>
    %73 = vector.extract_strided_slice %64 {offsets = [0, 0], sizes = [16, 1], strides = [1, 1]} : vector<16x4xf32> to vector<16x1xf32>
    %cst_30 = arith.constant 0.000000e+00 : f32
    %74 = vector.shape_cast %73 : vector<16x1xf32> to vector<16x1xf32>
    %75 = vector.broadcast %74 : vector<16x1xf32> to vector<16x80xf32>
    %76 = vector.broadcast %cst_30 : f32 to vector<16x80xf32>
    %77 = arith.select %72, %75, %76 : vector<16x80xi1>, vector<16x80xf32>
    %78 = arith.addf %65, %77 : vector<16x80xf32>
    %c0_31 = arith.constant 0 : index
    %c1_32 = arith.constant 1 : index
    %79 = vector.load %arg2[%c0_31, %c1_32] : memref<16x13xi32, #tpu.memory_space<vmem>>, vector<16x1xi32>
    %c0_33 = arith.constant 0 : index
    %c5_34 = arith.constant 5 : index
    %80 = vector.load %arg2[%c0_33, %c5_34] : memref<16x13xi32, #tpu.memory_space<vmem>>, vector<16x1xi32>
    %81 = vector.broadcast %79 : vector<16x1xi32> to vector<16x80xi32>
    %82 = arith.cmpi eq, %3, %81 : vector<16x80xi32>
    %83 = vector.broadcast %80 : vector<16x1xi32> to vector<16x80xi32>
    %84 = arith.cmpi eq, %3, %83 : vector<16x80xi32>
    %85 = arith.ori %82, %84 : vector<16x80xi1>
    %86 = vector.extract_strided_slice %64 {offsets = [0, 1], sizes = [16, 1], strides = [1, 1]} : vector<16x4xf32> to vector<16x1xf32>
    %cst_35 = arith.constant 0.000000e+00 : f32
    %87 = vector.shape_cast %86 : vector<16x1xf32> to vector<16x1xf32>
    %88 = vector.broadcast %87 : vector<16x1xf32> to vector<16x80xf32>
    %89 = vector.broadcast %cst_35 : f32 to vector<16x80xf32>
    %90 = arith.select %85, %88, %89 : vector<16x80xi1>, vector<16x80xf32>
    %91 = arith.addf %78, %90 : vector<16x80xf32>
    %c0_36 = arith.constant 0 : index
    %c2_37 = arith.constant 2 : index
    %92 = vector.load %arg2[%c0_36, %c2_37] : memref<16x13xi32, #tpu.memory_space<vmem>>, vector<16x1xi32>
    %c0_38 = arith.constant 0 : index
    %c6_39 = arith.constant 6 : index
    %93 = vector.load %arg2[%c0_38, %c6_39] : memref<16x13xi32, #tpu.memory_space<vmem>>, vector<16x1xi32>
    %94 = vector.broadcast %92 : vector<16x1xi32> to vector<16x80xi32>
    %95 = arith.cmpi eq, %3, %94 : vector<16x80xi32>
    %96 = vector.broadcast %93 : vector<16x1xi32> to vector<16x80xi32>
    %97 = arith.cmpi eq, %3, %96 : vector<16x80xi32>
    %98 = arith.ori %95, %97 : vector<16x80xi1>
    %99 = vector.extract_strided_slice %64 {offsets = [0, 2], sizes = [16, 1], strides = [1, 1]} : vector<16x4xf32> to vector<16x1xf32>
    %cst_40 = arith.constant 0.000000e+00 : f32
    %100 = vector.shape_cast %99 : vector<16x1xf32> to vector<16x1xf32>
    %101 = vector.broadcast %100 : vector<16x1xf32> to vector<16x80xf32>
    %102 = vector.broadcast %cst_40 : f32 to vector<16x80xf32>
    %103 = arith.select %98, %101, %102 : vector<16x80xi1>, vector<16x80xf32>
    %104 = arith.addf %91, %103 : vector<16x80xf32>
    %c0_41 = arith.constant 0 : index
    %c3_42 = arith.constant 3 : index
    %105 = vector.load %arg2[%c0_41, %c3_42] : memref<16x13xi32, #tpu.memory_space<vmem>>, vector<16x1xi32>
    %c0_43 = arith.constant 0 : index
    %c7_44 = arith.constant 7 : index
    %106 = vector.load %arg2[%c0_43, %c7_44] : memref<16x13xi32, #tpu.memory_space<vmem>>, vector<16x1xi32>
    %107 = vector.broadcast %105 : vector<16x1xi32> to vector<16x80xi32>
    %108 = arith.cmpi eq, %3, %107 : vector<16x80xi32>
    %109 = vector.broadcast %106 : vector<16x1xi32> to vector<16x80xi32>
    %110 = arith.cmpi eq, %3, %109 : vector<16x80xi32>
    %111 = arith.ori %108, %110 : vector<16x80xi1>
    %112 = vector.extract_strided_slice %64 {offsets = [0, 3], sizes = [16, 1], strides = [1, 1]} : vector<16x4xf32> to vector<16x1xf32>
    %cst_45 = arith.constant 0.000000e+00 : f32
    %113 = vector.shape_cast %112 : vector<16x1xf32> to vector<16x1xf32>
    %114 = vector.broadcast %113 : vector<16x1xf32> to vector<16x80xf32>
    %115 = vector.broadcast %cst_45 : f32 to vector<16x80xf32>
    %116 = arith.select %111, %114, %115 : vector<16x80xi1>, vector<16x80xf32>
    %117 = arith.addf %104, %116 : vector<16x80xf32>
    %c0_46 = arith.constant 0 : index
    %c0_47 = arith.constant 0 : index
    %118 = vector.load %arg3[%c0_46, %c0_47] : memref<80x32xf32, #tpu.memory_space<vmem>>, vector<80x32xf32>
    %cst_48 = arith.constant dense<0.000000e+00> : vector<16x32xf32>
    %119 = tpu.matmul %117, %118, %cst_48 {dimension_numbers = #tpu.dot_dimension_numbers<[1], [0], [0], [1], [0, 0, 1, 1], [], []>} : vector<16x80xf32>, vector<80x32xf32>, vector<16x32xf32> -> vector<16x32xf32>
    %c0_49 = arith.constant 0 : index
    %c12 = arith.constant 12 : index
    %120 = vector.load %arg2[%c0_49, %c12] : memref<16x13xi32, #tpu.memory_space<vmem>>, vector<16x1xi32>
    %121 = tpu.bitcast %120 : vector<16x1xi32> -> vector<16x1xf32>
    %122 = vector.broadcast %121 : vector<16x1xf32> to vector<16x32xf32>
    %123 = arith.mulf %119, %122 : vector<16x32xf32>
    %c0_50 = arith.constant 0 : index
    %c0_51 = arith.constant 0 : index
    %124 = vector.load %arg1[%c0_50, %c0_51] : memref<16x32xf32, #tpu.memory_space<vmem>>, vector<16x32xf32>
    %125 = arith.addf %123, %124 : vector<16x32xf32>
    %c0_52 = arith.constant 0 : index
    %c0_53 = arith.constant 0 : index
    %126 = vector.load %arg4[%c0_52, %c0_53] : memref<16x32xf32, #tpu.memory_space<vmem>>, vector<16x32xf32>
    tpu.vector_store %arg4[%c0_52, %c0_53], %125 {strides = array<i32>} : memref<16x32xf32, #tpu.memory_space<vmem>>, vector<16x32xf32>,
    return
  }
  func.func @transform_0(%arg0: i32) -> (i32, i32) {
    %c0_i32 = arith.constant 0 : i32
    %c0_i32_0 = arith.constant 0 : i32
    return %arg0, %c0_i32 : i32, i32
  }
  func.func @transform_1(%arg0: i32) -> (i32, i32) {
    %c0_i32 = arith.constant 0 : i32
    %c0_i32_0 = arith.constant 0 : i32
    return %arg0, %c0_i32 : i32, i32
  }
  func.func @transform_2(%arg0: i32) -> (i32, i32) {
    %c0_i32 = arith.constant 0 : i32
    %c0_i32_0 = arith.constant 0 : i32
    %c0_i32_1 = arith.constant 0 : i32
    return %c0_i32, %c0_i32_0 : i32, i32
  }
  func.func @transform_3(%arg0: i32) -> (i32, i32) {
    %c0_i32 = arith.constant 0 : i32
    %c0_i32_0 = arith.constant 0 : i32
    return %arg0, %c0_i32 : i32, i32
  }
}

</mosaic_0001>

<llo_original>
// kernel: tpu_custom_call.1
$region0: #{tpu_custom_call.1}
  #allocation0 [shape = 'u32[]', space=smem, size = 0x4, offset = 0x4, fixed_abs, tag = 'smem constant byte address 0x4 - core index']
  #allocation1 [shape = 'u32[144,128]{1,0:T(1,128)}', space=vmem, size = 0x12000, scoped, tag = 'internal scratch']
  %s0 = inlined_call_operand.vmem [shape: f32[16,32], index: 0, kind: input, shape index: {}]
  %s1 = inlined_call_operand.vmem [shape: s32[16,13], index: 1, kind: input, shape index: {}]
  %s2 = inlined_call_operand.vmem [shape: f32[80,32], index: 2, kind: input, shape index: {}]
  %s3 = inlined_call_operand.hbm [shape: f32[16,32], index: 3, kind: output, shape index: {}]
  %s4 = sld [smem:[#allocation0]]
  $region22: #{tpu_custom_call.1} parent=0
    _
  %s6 = ssub.s32 1, %s4
  %s7 = scalar_select 0, %s6, %s4
  $region1: #{tpu_custom_call.1} parent=0
    #allocation2 [shape = 'u8[8192]{0}', space=vmem, size = 0x2000, scoped, tag = 'output window, operand 0, single buffered']
    #allocation3 [shape = 's32[1]{0}', space=sflag, size = 0x4, scoped, tag = 'scoped memory for tpu_custom_call.1']
    %8 = vsyncpa [#allocation3], 0
    // Predicated region
    $region2: #{tpu_custom_call.1} parent=1 // pred_check
      _
    $region3: #{tpu_custom_call.1} parent=1 // pred_check_branch
      %10 = sbr.rel (0) target = $region5
    $region4: #{tpu_custom_call.1} parent=1 // pred_region
      _
    $region5: #{tpu_custom_call.1} parent=1 // pred_fallthru
      _
    // Predicated region
    $region6: #{tpu_custom_call.1} parent=1 // pred_check
      _
    $region7: #{tpu_custom_call.1} parent=1 // pred_check_branch
      %12 = sbr.rel (0) target = $region9
    $region8: #{tpu_custom_call.1} parent=1 // pred_region
      _
    $region9: #{tpu_custom_call.1} parent=1 // pred_fallthru
      _
    // Predicated region
    $region10: #{tpu_custom_call.1} parent=1 // pred_check
      _
    $region11: #{tpu_custom_call.1} parent=1 // pred_check_branch
      %14 = sbr.rel (0) target = $region13
    $region12: #{tpu_custom_call.1} parent=1 // pred_region
      _
    $region13: #{tpu_custom_call.1} parent=1 // pred_fallthru
      _
    %v15 = vld [vmem:[%s0] sm:$0xff]
    %v16 = vld [vmem:[%s0 + $0x8] sm:$0xff]
    %v17 = vld [vmem:[%s2] sm:$0xff]
    %v18 = vld [vmem:[%s2 + $0x8] sm:$0xff]
    %v19 = vld [vmem:[%s2 + $0x10] sm:$0xff]
    %v20 = vld [vmem:[%s2 + $0x18] sm:$0xff]
    %v21 = vld [vmem:[%s2 + $0x20] sm:$0xff]
    %v22 = vld [vmem:[%s2 + $0x28] sm:$0xff]
    %v23 = vld [vmem:[%s2 + $0x30] sm:$0xff]
    %v24 = vld [vmem:[%s2 + $0x38] sm:$0xff]
    %v25 = vld [vmem:[%s2 + $0x40] sm:$0xff]
    %v26 = vld [vmem:[%s2 + $0x48] sm:$0xff]
    %vm27 = vcmask 261120
    %v29 = vsel %vm27, %v15, 0
    %v32 = vsel %vm27, %v16, 0
    %v35 = vsel %vm27, %v17, 0
    %v38 = vsel %vm27, %v18, 0
    %v41 = vsel %vm27, %v19, 0
    %v44 = vsel %vm27, %v20, 0
    %v47 = vsel %vm27, %v21, 0
    %v50 = vsel %vm27, %v22, 0
    %v53 = vsel %vm27, %v23, 0
    %v56 = vsel %vm27, %v24, 0
    %v59 = vsel %vm27, %v25, 0
    %v62 = vsel %vm27, %v26, 0
    %64 = vmatprep.subr.mxu0 0.0
    %65 = vmatpush1.xpose.msra.mxu0 %v35
    %66 = vmatprep.subr.mxu0 0.0
    %67 = vmatpush1.xpose.msra.mxu0 %v38
    %68 = vmatprep.subr.mxu0 0.0
    %69 = vmatpush1.xpose.msra.mxu0 %v41
    %70 = vmatprep.subr.mxu0 0.0
    %71 = vmatpush1.xpose.msra.mxu0 %v44
    %72 = vmatprep.subr.mxu0 0.0
    %73 = vmatpush1.xpose.msra.mxu0 %v47
    %74 = vmatprep.subr.mxu0 0.0
    %75 = vmatpush1.xpose.msra.mxu0 %v50
    %76 = vmatprep.subr.mxu0 0.0
    %77 = vmatpush1.xpose.msra.mxu0 %v53
    %78 = vmatprep.subr.mxu0 0.0
    %79 = vmatpush1.xpose.msra.mxu0 %v56
    %80 = vmatprep.subr.mxu0 0.0
    %81 = vmatpush1.xpose.msra.mxu0 %v59
    %82 = vmatprep.subr.mxu0 0.0
    %83 = vmatpush1.xpose.msra.mxu0 %v62
    %84 = vmatprep.subr.mxu0 0.0
    %85 = vmatpush1.xpose.msra.mxu0 0.0
    %86 = vmatprep.subr.mxu0 0.0
    %87 = vmatpush1.xpose.msra.mxu0 0.0
    %88 = vmatprep.subr.mxu0 0.0
    %89 = vmatpush1.xpose.msra.mxu0 0.0
    %90 = vmatprep.subr.mxu0 0.0
    %91 = vmatpush1.xpose.msra.mxu0 0.0
    %92 = vmatprep.subr.mxu0 0.0
    %93 = vmatpush1.xpose.msra.mxu0 0.0
    %94 = vmatprep.subr.mxu0 0.0
    %95 = vmatpush1.xpose.msra.mxu0 0.0
    %96 = vmatprep.subr.mxu0 0.0
    %97 = vmatpush1.xpose.msra.mxu0 0.0
    %98 = vmatprep.subr.mxu0 0.0
    %99 = vmatpush1.xpose.msra.mxu0 0.0
    %100 = vmatprep.subr.mxu0 0.0
    %101 = vmatpush1.xpose.msra.mxu0 0.0
    %102 = vmatprep.subr.mxu0 0.0
    %103 = vmatpush1.xpose.msra.mxu0 0.0
    %104 = vmatprep.subr.mxu0 0.0
    %105 = vmatpush1.xpose.msra.mxu0 0.0
    %106 = vmatprep.subr.mxu0 0.0
    %107 = vmatpush1.xpose.msra.mxu0 0.0
    %108 = vmatprep.subr.mxu0 0.0
    %109 = vmatpush1.xpose.msra.mxu0 0.0
    %110 = vmatprep.subr.mxu0 0.0
    %111 = vmatpush1.xpose.msra.mxu0 0.0
    %112 = vmatprep.subr.mxu0 0.0
    %113 = vmatpush1.xpose.msra.mxu0 0.0
    %114 = vmatprep.subr.mxu0 0.0
    %115 = vmatpush1.xpose.msra.mxu0 0.0
    %116 = vmatprep.subr.mxu0 0.0
    %117 = vmatpush1.xpose.msra.mxu0 0.0
    %118 = vmatprep.subr.mxu0 0.0
    %119 = vmatpush1.xpose.msra.mxu0 0.0
    %120 = vmatprep.subr.mxu0 0.0
    %121 = vmatpush1.xpose.msra.mxu0 0.0
    %122 = vmatprep.subr.mxu0 0.0
    %123 = vmatpush1.xpose.msra.mxu0 0.0
    %124 = vmatprep.subr.mxu0 0.0
    %125 = vmatpush1.xpose.msra.mxu0 0.0
    %126 = vmatprep.subr.mxu0 0.0
    %127 = vmatpush1.xpose.msra.mxu0 0.0
    %128 = vmatprep.mubr.f32.mxu0 0.0
    %129 = vmatmul.mubr.f32.gmra.mrb[0].mxu0 %v29
    %v130 = vpop.f32.mrb[0].mxu0
    %v131 = vadd.f32 0.0, %v130
    %v132 = vpop.f32.mrb[0].mxu0
    %133 = vmatprep.mubr.f32.mxu0 0.0
    %134 = vmatmul.mubr.f32.gmra.mrb[0].mxu0 %v32
    %v135 = vpop.f32.mrb[0].mxu0
    %v136 = vadd.f32 0.0, %v135
    %v137 = vpop.f32.mrb[0].mxu0
    %138 = vdwg.mxu0
    %v139 = vlaneseq
    %v140 = vand.u32 %v139, 127
    %v141 = vld [vmem:[%s1] sm:$0xff]
    %v142 = vld [vmem:[%s1 + $0x8] sm:$0xff]
    %143 = vset.pattern.permute.xlu0 0
    %144 = vperm.xlu0 %143, %v141
    %v145 = vpop.permute.xlu0 %144
    %146 = vset.pattern.permute.xlu0 0
    %147 = vperm.xlu0 %146, %v142
    %v148 = vpop.permute.xlu0 %147
    %vm149 = vcmp.eq.s32.totalorder %v140, %v145
    %vm150 = vcmp.eq.s32.totalorder %v140, %v148
    %151 = vset.pattern.permute.xlu0 4
    %152 = vperm.xlu0 %151, %v141
    %v153 = vpop.permute.xlu0 %152
    %154 = vset.pattern.permute.xlu0 4
    %155 = vperm.xlu0 %154, %v142
    %v156 = vpop.permute.xlu0 %155
    %vm157 = vcmp.eq.s32.totalorder %v140, %v153
    %vm158 = vcmp.eq.s32.totalorder %v140, %v156
    %vm159 = vmor %vm149, %vm157
    %vm160 = vmor %vm150, %vm158
    %v161 = vsel %vm159, %v131, 0.0
    %v162 = vsel %vm160, %v136, 0.0
    %vm163 = vcmask 654336
    %v164 = vsel %vm163, %v161, 0.0
    %165 = vadd.xlane.f32.xlu0 %v164
    %v166 = vpop.xlane.xlu0 %165
    %v167 = vsel %vm163, %v162, 0.0
    %168 = vadd.xlane.f32.xlu0 %v167
    %v169 = vpop.xlane.xlu0 %168
    %170 = vset.pattern.permute.xlu0 1
    %171 = vperm.xlu0 %170, %v141
    %v172 = vpop.permute.xlu0 %171
    %173 = vset.pattern.permute.xlu0 1
    %174 = vperm.xlu0 %173, %v142
    %v175 = vpop.permute.xlu0 %174
    %vm176 = vcmp.eq.s32.totalorder %v140, %v172
    %vm177 = vcmp.eq.s32.totalorder %v140, %v175
    %178 = vset.pattern.permute.xlu0 5
    %179 = vperm.xlu0 %178, %v141
    %v180 = vpop.permute.xlu0 %179
    %181 = vset.pattern.permute.xlu0 5
    %182 = vperm.xlu0 %181, %v142
    %v183 = vpop.permute.xlu0 %182
    %vm184 = vcmp.eq.s32.totalorder %v140, %v180
    %vm185 = vcmp.eq.s32.totalorder %v140, %v183
    %vm186 = vmor %vm176, %vm184
    %vm187 = vmor %vm177, %vm185
    %v188 = vsel %vm186, %v131, 0.0
    %v189 = vsel %vm187, %v136, 0.0
    %v190 = vsel %vm163, %v188, 0.0
    %191 = vadd.xlane.f32.xlu0 %v190
    %v192 = vpop.xlane.xlu0 %191
    %v193 = vsel %vm163, %v189, 0.0
    %194 = vadd.xlane.f32.xlu0 %v193
    %v195 = vpop.xlane.xlu0 %194
    %196 = vset.pattern.permute.xlu0 2
    %197 = vperm.xlu0 %196, %v141
    %v198 = vpop.permute.xlu0 %197
    %199 = vset.pattern.permute.xlu0 2
    %200 = vperm.xlu0 %199, %v142
    %v201 = vpop.permute.xlu0 %200
    %vm202 = vcmp.eq.s32.totalorder %v140, %v198
    %vm203 = vcmp.eq.s32.totalorder %v140, %v201
    %204 = vset.pattern.permute.xlu0 6
    %205 = vperm.xlu0 %204, %v141
    %v206 = vpop.permute.xlu0 %205
    %207 = vset.pattern.permute.xlu0 6
    %208 = vperm.xlu0 %207, %v142
    %v209 = vpop.permute.xlu0 %208
    %vm210 = vcmp.eq.s32.totalorder %v140, %v206
    %vm211 = vcmp.eq.s32.totalorder %v140, %v209
    %vm212 = vmor %vm202, %vm210
    %vm213 = vmor %vm203, %vm211
    %v214 = vsel %vm212, %v131, 0.0
    %v215 = vsel %vm213, %v136, 0.0
    %v216 = vsel %vm163, %v214, 0.0
    %217 = vadd.xlane.f32.xlu0 %v216
    %v218 = vpop.xlane.xlu0 %217
    %v219 = vsel %vm163, %v215, 0.0
    %220 = vadd.xlane.f32.xlu0 %v219
    %v221 = vpop.xlane.xlu0 %220
    %222 = vset.pattern.permute.xlu0 3
    %223 = vperm.xlu0 %222, %v141
    %v224 = vpop.permute.xlu0 %223
    %225 = vset.pattern.permute.xlu0 3
    %226 = vperm.xlu0 %225, %v142
    %v227 = vpop.permute.xlu0 %226
    %vm228 = vcmp.eq.s32.totalorder %v140, %v224
    %vm229 = vcmp.eq.s32.totalorder %v140, %v227
    %230 = vset.pattern.permute.xlu0 7
    %231 = vperm.xlu0 %230, %v141
    %v232 = vpop.permute.xlu0 %231
    %233 = vset.pattern.permute.xlu0 7
    %234 = vperm.xlu0 %233, %v142
    %v235 = vpop.permute.xlu0 %234
    %vm236 = vcmp.eq.s32.totalorder %v140, %v232
    %vm237 = vcmp.eq.s32.totalorder %v140, %v235
    %vm238 = vmor %vm228, %vm236
    %vm239 = vmor %vm229, %vm237
    %v240 = vsel %vm238, %v131, 0.0
    %v241 = vsel %vm239, %v136, 0.0
    %v242 = vsel %vm163, %v240, 0.0
    %243 = vadd.xlane.f32.xlu0 %v242
    %v244 = vpop.xlane.xlu0 %243
    %v245 = vsel %vm163, %v241, 0.0
    %246 = vadd.xlane.f32.xlu0 %v245
    %v247 = vpop.xlane.xlu0 %246
    %vm248 = vcmask 7168
    %v249 = vsel %vm248, %v166, %v192
    %v250 = vsel %vm248, %v169, %v195
    %vm251 = vcmask 15360
    %v252 = vsel %vm251, %v249, %v218
    %v253 = vsel %vm251, %v250, %v221
    %vm254 = vcmask 23552
    %v255 = vsel %vm254, %v252, %v244
    %v256 = vsel %vm254, %v253, %v247
    %v257 = vmul.f32 %v255, 0.17677669
    %v258 = vmul.f32 %v256, 0.17677669
    %vm259 = vcmp.eq.s32.totalorder %v141, 0
    %vm260 = vcmp.eq.s32.totalorder %v142, 0
    %263 = vrot.lane.b32.xlu0 %v257, 8
    %v264 = vpop.permute.xlu0 %263
    %265 = vrot.lane.b32.xlu0 %v258, 8
    %v266 = vpop.permute.xlu0 %265
    %v269 = vsel %vm259, -1e+09, %v264
    %v270 = vsel %vm260, -1e+09, %v266
    %vm271 = vcmask 97344
    %v272 = vsel %vm271, %v269, -inf
    %273 = vmax.xlane.f32.xlu0 %v272
    %v274 = vpop.xlane.xlu0 %273
    %v275 = vsel %vm271, %v270, -inf
    %276 = vmax.xlane.f32.xlu0 %v275
    %v277 = vpop.xlane.xlu0 %276
    %v278 = vsub.f32 %v269, %v274
    %v279 = vsub.f32 %v270, %v277
    %v280 = vmul.f32 %v278, 1.442695
    %v281 = vpow.pop %v280
    %v282 = vmul.f32 %v279, 1.442695
    %v283 = vpow.pop %v282
    %286 = vrot.lane.b32.xlu0 %v281, 120
    %v287 = vpop.permute.xlu0 %286
    %288 = vrot.lane.b32.xlu0 %v283, 120
    %v289 = vpop.permute.xlu0 %288
    %vm292 = vcmask 31744
    %v293 = vsel %vm292, %v287, 0.0
    %294 = vadd.xlane.f32.xlu0 %v293
    %v295 = vpop.xlane.xlu0 %294
    %v296 = vsel %vm292, %v289, 0.0
    %297 = vadd.xlane.f32.xlu0 %v296
    %v298 = vpop.xlane.xlu0 %297
    %v299 = vrcp.pop %v295
    %v300 = vmul.f32 %v281, %v299
    %v301 = vrcp.pop %v298
    %v302 = vmul.f32 %v283, %v301
    %304 = vset.pattern.permute.xlu0 8
    %305 = vperm.xlu0 %304, %v300
    %v306 = vpop.permute.xlu0 %305
    %309 = vset.pattern.permute.xlu0 8
    %310 = vperm.xlu0 %309, %v302
    %v311 = vpop.permute.xlu0 %310
    %v313 = vsel %vm159, %v306, 0.0
    %v314 = vsel %vm160, %v311, 0.0
    %v315 = vadd.f32 %v313, 0.0
    %v316 = vadd.f32 %v314, 0.0
    %317 = vset.pattern.permute.xlu0 9
    %318 = vperm.xlu0 %317, %v300
    %v319 = vpop.permute.xlu0 %318
    %321 = vset.pattern.permute.xlu0 9
    %322 = vperm.xlu0 %321, %v302
    %v323 = vpop.permute.xlu0 %322
    %v325 = vsel %vm186, %v319, 0.0
    %v326 = vsel %vm187, %v323, 0.0
    %v327 = vadd.f32 %v315, %v325
    %v328 = vadd.f32 %v316, %v326
    %329 = vset.pattern.permute.xlu0 10
    %330 = vperm.xlu0 %329, %v300
    %v331 = vpop.permute.xlu0 %330
    %333 = vset.pattern.permute.xlu0 10
    %334 = vperm.xlu0 %333, %v302
    %v335 = vpop.permute.xlu0 %334
    %v337 = vsel %vm212, %v331, 0.0
    %v338 = vsel %vm213, %v335, 0.0
    %v339 = vadd.f32 %v327, %v337
    %v340 = vadd.f32 %v328, %v338
    %341 = vset.pattern.permute.xlu0 11
    %342 = vperm.xlu0 %341, %v300
    %v343 = vpop.permute.xlu0 %342
    %345 = vset.pattern.permute.xlu0 11
    %346 = vperm.xlu0 %345, %v302
    %v347 = vpop.permute.xlu0 %346
    %v349 = vsel %vm238, %v343, 0.0
    %v350 = vsel %vm239, %v347, 0.0
    %v351 = vadd.f32 %v339, %v349
    %v352 = vadd.f32 %v340, %v350
    %v354 = vsel %vm163, %v351, 0
    %v357 = vsel %vm163, %v352, 0
    %359 = vmatprep.subr.mxu0 0.0
    %360 = vmatpush1.msra.mxu0 %v17
    %361 = vmatprep.subr.mxu0 0.0
    %362 = vmatpush1.msra.mxu0 %v18
    %363 = vmatprep.subr.mxu0 0.0
    %364 = vmatpush1.msra.mxu0 %v19
    %365 = vmatprep.subr.mxu0 0.0
    %366 = vmatpush1.msra.mxu0 %v20
    %367 = vmatprep.subr.mxu0 0.0
    %368 = vmatpush1.msra.mxu0 %v21
    %369 = vmatprep.subr.mxu0 0.0
    %370 = vmatpush1.msra.mxu0 %v22
    %371 = vmatprep.subr.mxu0 0.0
    %372 = vmatpush1.msra.mxu0 %v23
    %373 = vmatprep.subr.mxu0 0.0
    %374 = vmatpush1.msra.mxu0 %v24
    %375 = vmatprep.subr.mxu0 0.0
    %376 = vmatpush1.msra.mxu0 %v25
    %377 = vmatprep.subr.mxu0 0.0
    %378 = vmatpush1.msra.mxu0 %v26
    %379 = vmatprep.subr.mxu0 0.0
    %380 = vmatpush1.msra.mxu0 0.0
    %381 = vmatprep.subr.mxu0 0.0
    %382 = vmatpush1.msra.mxu0 0.0
    %383 = vmatprep.subr.mxu0 0.0
    %384 = vmatpush1.msra.mxu0 0.0
    %385 = vmatprep.subr.mxu0 0.0
    %386 = vmatpush1.msra.mxu0 0.0
    %387 = vmatprep.subr.mxu0 0.0
    %388 = vmatpush1.msra.mxu0 0.0
    %389 = vmatprep.subr.mxu0 0.0
    %390 = vmatpush1.msra.mxu0 0.0
    %391 = vmatprep.subr.mxu0 0.0
    %392 = vmatpush1.msra.mxu0 0.0
    %393 = vmatprep.subr.mxu0 0.0
    %394 = vmatpush1.msra.mxu0 0.0
    %395 = vmatprep.subr.mxu0 0.0
    %396 = vmatpush1.msra.mxu0 0.0
    %397 = vmatprep.subr.mxu0 0.0
    %398 = vmatpush1.msra.mxu0 0.0
    %399 = vmatprep.subr.mxu0 0.0
    %400 = vmatpush1.msra.mxu0 0.0
    %401 = vmatprep.subr.mxu0 0.0
    %402 = vmatpush1.msra.mxu0 0.0
    %403 = vmatprep.subr.mxu0 0.0
    %404 = vmatpush1.msra.mxu0 0.0
    %405 = vmatprep.subr.mxu0 0.0
    %406 = vmatpush1.msra.mxu0 0.0
    %407 = vmatprep.subr.mxu0 0.0
    %408 = vmatpush1.msra.mxu0 0.0
    %409 = vmatprep.subr.mxu0 0.0
    %410 = vmatpush1.msra.mxu0 0.0
    %411 = vmatprep.subr.mxu0 0.0
    %412 = vmatpush1.msra.mxu0 0.0
    %413 = vmatprep.subr.mxu0 0.0
    %414 = vmatpush1.msra.mxu0 0.0
    %415 = vmatprep.subr.mxu0 0.0
    %416 = vmatpush1.msra.mxu0 0.0
    %417 = vmatprep.subr.mxu0 0.0
    %418 = vmatpush1.msra.mxu0 0.0
    %419 = vmatprep.subr.mxu0 0.0
    %420 = vmatpush1.msra.mxu0 0.0
    %421 = vmatprep.subr.mxu0 0.0
    %422 = vmatpush1.msra.mxu0 0.0
    %423 = vmatprep.mubr.f32.mxu0 0.0
    %424 = vmatmul.mubr.f32.gmra.mrb[0].mxu0 %v354
    %v425 = vpop.f32.mrb[0].mxu0
    %v426 = vadd.f32 0.0, %v425
    %v427 = vpop.f32.mrb[0].mxu0
    %428 = vmatprep.mubr.f32.mxu0 0.0
    %429 = vmatmul.mubr.f32.gmra.mrb[0].mxu0 %v357
    %v430 = vpop.f32.mrb[0].mxu0
    %v431 = vadd.f32 0.0, %v430
    %v432 = vpop.f32.mrb[0].mxu0
    %433 = vdwg.mxu0
    %434 = vset.pattern.permute.xlu0 12
    %435 = vperm.xlu0 %434, %v141
    %v436 = vpop.permute.xlu0 %435
    %438 = vset.pattern.permute.xlu0 12
    %439 = vperm.xlu0 %438, %v142
    %v440 = vpop.permute.xlu0 %439
    %v442 = vmul.f32 %v426, %v436
    %v443 = vmul.f32 %v431, %v440
    %v444 = vadd.f32 %v442, %v15
    %v445 = vadd.f32 %v443, %v16
    %446 = vst.msk [vmem:[#allocation2] sm:$0xff] %vm27, %v444
    %447 = vst.msk [vmem:[#allocation2 + $0x8] sm:$0xff] %vm27, %v445
    // Predicated region
    $region14: #{tpu_custom_call.1} parent=1 // pred_check
      _
    $region15: #{tpu_custom_call.1} parent=1 // pred_check_branch
      %449 = sbr.rel (0) target = $region17
    $region16: #{tpu_custom_call.1} parent=1 // pred_region
      %s451 = ssub.s32 256, 256
      %452 = vsyncadd [#allocation3], %s451
      %s453 = sshll.u32 [#allocation2], 4
      %s454 = int_to_ptr.vmem [resolvable:$true] %s453
      %459 = dma.vmem_to_hbm [thread:$0]  %s454, 256, %s3, [#allocation3], 128, 128, 8
    $region17: #{tpu_custom_call.1} parent=1 // pred_fallthru
      _
    // Predicated region
    $region18: #{tpu_custom_call.1} parent=1 // pred_check
      _
    $region19: #{tpu_custom_call.1} parent=1 // pred_check_branch
      %461 = sbr.rel (0) target = $region21
    $region20: #{tpu_custom_call.1} parent=1 // pred_region
      %462 = dma.done [#allocation3], 256
    $region21: #{tpu_custom_call.1} parent=1 // pred_fallthru
      _
    %463 = vsyncpa [#allocation3], 1

</llo_original>
